<compile_context>
chip_gen: v7x
topology: tpu7x:2x2x1
jax: 0.10.0
libtpu: 0.0.40
codegen_flags: <defaults>
</compile_context>

<pallas_src>
import jax
import jax.numpy as jnp
import numpy as np
from jax import lax
from jax.experimental import pallas as pl
from jax.experimental.pallas import tpu as pltpu


def head_kernel(x_ref, w_ref, o_ref):
    """x_ref: (nb, C_in, t_hw), w_ref: (C_out, C_in), o_ref: (nb, C_out, t_hw)."""
    w = w_ref[...]
    nb = x_ref.shape[0]
    if nb == 1:
        o_ref[0] = jnp.dot(
            w, x_ref[0], preferred_element_type=jnp.float32
        ).astype(o_ref.dtype)
    else:
        # Visible loop (not a static unroll) keeps exactly one f32 matmul result live.
        def body(b, carry):
            o_ref[b] = jnp.dot(
                w, x_ref[b], preferred_element_type=jnp.float32
            ).astype(o_ref.dtype)
            return carry

        lax.fori_loop(0, nb, body, 0)


def _round_up(x, m):
    return ((x + m - 1) // m) * m


def _vmem_budget_bytes():
    """Generation-aware VMEM budget: ~3/4 of physical, capped at 96 MiB.

    v5e/v6e (128 MiB physical) -> 96 MiB; v7x (64 MiB per TC) -> 48 MiB.
    Conservative 64 MiB physical assumption if the query is unavailable.
    """
    cap = 64 << 20
    try:
        info = pltpu.get_tpu_info()
        cap = int(getattr(info, "vmem_capacity_bytes", cap))
    except Exception:
        pass
    return int(min((cap * 3) // 4, 96 << 20))


def _pick_hw_tile(hw, max_tile=2048):
    """Fixed multiple-of-128 lane tile; boundary block (if any) is padded by Pallas."""
    return int(min(_round_up(hw, 128), max_tile))


def _pick_batch_tile(n, c_in, c_out, t_hw, itemsize, budget_bytes,
                     target_step_bytes=8 << 20):
    """Images per grid step: hit a per-step byte target, stay under the VMEM budget."""
    # Double-buffered in + out tiles per image.
    per_img = 2 * (c_in + c_out) * t_hw * itemsize
    # Fixed cost: double-buffered weight + one (C_out, t_hw) f32 dot temporary.
    fixed = 2 * c_out * c_in * itemsize + c_out * t_hw * 4
    by_budget = max(1, (int(budget_bytes * 0.8) - fixed) // max(per_img, 1))
    by_target = max(1, target_step_bytes // max((c_in + c_out) * t_hw * itemsize, 1))
    return int(max(1, min(n, by_budget, by_target)))


def head_pallas(x_nchw, w):
    """x_nchw: (N, C_in, H, W); w: (C_out, C_in). Returns (N, C_out, H, W)."""
    N, C_in, H, W = x_nchw.shape
    C_out = w.shape[0]
    HW = H * W
    x = x_nchw.reshape(N, C_in, HW)  # free reshape, no transpose / extra HBM pass
    itemsize = x.dtype.itemsize

    budget = _vmem_budget_bytes()
    t_hw = _pick_hw_tile(HW)
    nb = _pick_batch_tile(N, C_in, C_out, t_hw, itemsize, budget)

    n_tiles = pl.cdiv(N, nb)
    hw_tiles = pl.cdiv(HW, t_hw)
    # Keep >=2 grid steps along a parallel axis so v7x can shard across both TCs.
    if n_tiles * hw_tiles == 1:
        if N >= 2:
            nb = max(1, (N + 1) // 2)
            n_tiles = pl.cdiv(N, nb)
        elif HW > 128:
            t_hw = _round_up(pl.cdiv(HW, 2), 128)
            hw_tiles = pl.cdiv(HW, t_hw)

    grid = (n_tiles, hw_tiles)

    cost = pl.CostEstimate(
        flops=2 * N * C_out * C_in * HW,
        transcendentals=0,
        bytes_accessed=(N * C_in * HW * itemsize
                        + N * C_out * HW * itemsize
                        + C_out * C_in * w.dtype.itemsize),
    )

    out = pl.pallas_call(
        head_kernel,
        out_shape=jax.ShapeDtypeStruct((N, C_out, HW), x_nchw.dtype),
        grid_spec=pltpu.PrefetchScalarGridSpec(
            num_scalar_prefetch=0,
            grid=grid,
            in_specs=[
                pl.BlockSpec((nb, C_in, t_hw), lambda b, t: (b, 0, t)),  # activations
                pl.BlockSpec((C_out, C_in), lambda b, t: (0, 0)),        # 1x1 conv weight
            ],
            out_specs=pl.BlockSpec((nb, C_out, t_hw), lambda b, t: (b, 0, t)),
        ),
        compiler_params=pltpu.CompilerParams(
            dimension_semantics=("parallel", "parallel"),
            vmem_limit_bytes=budget,
        ),
        cost_estimate=cost,
    )(x, w)

    return out.reshape(N, C_out, H, W)


def head_ref(x_nchw, w):
    """Pure-JAX reference: bias-free 1x1 convolution."""
    return jnp.einsum("oc,nchw->nohw", w, x_nchw)


if __name__ == "__main__":
    # Module defaults: inchannel=96, outchannel=55; small spatial size for the test.
    N, C_in, C_out, H, W = 2, 96, 55, 16, 16

    key = jax.random.PRNGKey(0)
    kx, kw = jax.random.split(key)
    x = jax.random.normal(kx, (N, C_in, H, W), jnp.float32)
    # torch Conv2d weight is (C_out, C_in, 1, 1); the kernel takes it squeezed to (C_out, C_in).
    w = 0.1 * jax.random.normal(kw, (C_out, C_in), jnp.float32)

    out = head_pallas(x, w)
    out = jax.block_until_ready(out)

    ref = head_ref(x, w)
    np.testing.assert_allclose(np.asarray(out), np.asarray(ref), rtol=1e-4, atol=1e-4)

    print("KERNEL_OK")
</pallas_src>

<mosaic_0001>
module attributes {stable_mosaic.version = 11 : i64} {
  func.func @head_kernel(%arg0: i32, %arg1: i32, %arg2: memref<1x96x256xf32, #tpu.memory_space<vmem>>, %arg3: memref<55x96xf32, #tpu.memory_space<vmem>>, %arg4: memref<1x55x256xf32, #tpu.memory_space<vmem>>) attributes {dimension_semantics = [#tpu.dimension_semantics<parallel>, #tpu.dimension_semantics<parallel>], iteration_bounds = array<i64: 2, 1>, scalar_prefetch = 0 : i64, scratch_operands = 0 : i64, tpu.core_type = #tpu.core_type<tc>, window_params = [{transform_indices = @transform_0, window_bounds = array<i64: 1, 96, 256>}, {pipeline_mode = #tpu.pipeline_mode<synchronous>, transform_indices = @transform_1, window_bounds = array<i64: 55, 96>}, {transform_indices = @transform_2, window_bounds = array<i64: 1, 55, 256>}]} {
    %c0 = arith.constant 0 : index
    %c0_0 = arith.constant 0 : index
    %0 = vector.load %arg3[%c0, %c0_0] : memref<55x96xf32, #tpu.memory_space<vmem>>, vector<55x96xf32>
    %c0_1 = arith.constant 0 : index
    %c0_2 = arith.constant 0 : index
    %c0_3 = arith.constant 0 : index
    %1 = vector.load %arg2[%c0_1, %c0_2, %c0_3] : memref<1x96x256xf32, #tpu.memory_space<vmem>>, vector<1x96x256xf32>
    %2 = vector.shape_cast %1 : vector<1x96x256xf32> to vector<96x256xf32>
    %cst = arith.constant dense<0.000000e+00> : vector<55x256xf32>
    %3 = tpu.matmul %0, %2, %cst {dimension_numbers = #tpu.dot_dimension_numbers<[1], [0], [0], [1], [0, 0, 1, 1], [], []>} : vector<55x96xf32>, vector<96x256xf32>, vector<55x256xf32> -> vector<55x256xf32>
    %c0_4 = arith.constant 0 : index
    %c0_5 = arith.constant 0 : index
    %c0_6 = arith.constant 0 : index
    %4 = vector.load %arg4[%c0_4, %c0_5, %c0_6] : memref<1x55x256xf32, #tpu.memory_space<vmem>>, vector<1x55x256xf32>
    %5 = vector.shape_cast %4 : vector<1x55x256xf32> to vector<55x256xf32>
    %6 = vector.shape_cast %3 : vector<55x256xf32> to vector<1x55x256xf32>
    tpu.vector_store %arg4[%c0_4, %c0_5, %c0_6], %6 {strides = array<i32>} : memref<1x55x256xf32, #tpu.memory_space<vmem>>, vector<1x55x256xf32>,
    return
  }
  func.func @transform_0(%arg0: i32, %arg1: i32) -> (i32, i32, i32) {
    %c0_i32 = arith.constant 0 : i32
    %c0_i32_0 = arith.constant 0 : i32
    return %arg0, %c0_i32, %arg1 : i32, i32, i32
  }
  func.func @transform_1(%arg0: i32, %arg1: i32) -> (i32, i32) {
    %c0_i32 = arith.constant 0 : i32
    %c0_i32_0 = arith.constant 0 : i32
    %c0_i32_1 = arith.constant 0 : i32
    return %c0_i32, %c0_i32_0 : i32, i32
  }
  func.func @transform_2(%arg0: i32, %arg1: i32) -> (i32, i32, i32) {
    %c0_i32 = arith.constant 0 : i32
    %c0_i32_0 = arith.constant 0 : i32
    return %arg0, %c0_i32, %arg1 : i32, i32, i32
  }
}

</mosaic_0001>

<llo_original>
// kernel: tpu_custom_call.1
$region0: #{tpu_custom_call.1}
  #allocation0 [shape = 'u32[]', space=smem, size = 0x4, offset = 0x4, fixed_abs, tag = 'smem constant byte address 0x4 - core index']
  #allocation1 [shape = 'u32[144,128]{1,0:T(1,128)}', space=vmem, size = 0x12000, scoped, tag = 'internal scratch']
  %s0 = inlined_call_operand.hbm [shape: f32[2,96,256], index: 0, kind: input, shape index: {}]
  %s1 = inlined_call_operand.hbm [shape: f32[55,96], index: 1, kind: input, shape index: {}]
  %s2 = inlined_call_operand.vmem [shape: f32[2,55,256], index: 2, kind: output, shape index: {}]
  %s3 = sld [smem:[#allocation0]]
  $region49: #{tpu_custom_call.1} parent=0
    _
  %s5 = ssub.s32 1, %s3
  %s6 = scalar_select 0, %s5, %s3
  $region1: #{tpu_custom_call.1} parent=0
    #allocation2 [shape = 'u8[196608]{0}', space=vmem, size = 0x30000, scoped, tag = 'input window, operand 0']
    #allocation3 [shape = 's32[2]{0}', space=sflag, size = 0x8, scoped, tag = 'scoped memory for tpu_custom_call.1']
    #allocation4 [shape = 'u8[28672]{0}', space=vmem, size = 0x7000, scoped, tag = 'input window, operand 1, single buffered']
    #allocation5 [shape = 's32[1]{0}', space=sflag, size = 0x4, scoped, tag = 'scoped memory for tpu_custom_call.1']
    %7 = vsyncpa [#allocation3], 0
    %s8 = scalar_lea.sflag [#allocation3], 1
    %9 = vsyncpa %s8, 0
    %10 = vsyncpa [#allocation5], 0
    loop: start=0, step=1, limit=4
    $region2: #{tpu_custom_call.1} parent=1 // loop_pre_header
      _
    $region3: #{tpu_custom_call.1} parent=1 // loop_header
      %s12 = sphi 0, %s16
      %p13 = scmp.ge.s32.totalorder %s12, 4
      %s19 = sphi 0, %s31
      %s20 = sphi 0, %s27
      %s21 = sphi 0, %s19
      %s22 = sphi 0, %s20
      %s23 = sphi 0, %s21
      %s24 = sphi 0, %s22
      %s36 = sphi 0, %s38
      %s39 = sphi 0, %s36
      %s40 = sphi 0, %s39
      %s56 = sphi 0, %s40
      %s60 = sphi 0, %s60
      %s62 = sphi 0, %s60
      %s63 = sphi 0, %s62
      %s77 = sphi 0, %s63
      %s85 = sphi 0, %s87
      %s88 = sphi 0, %s85
      %s89 = sphi 0, %s88
      %s105 = sphi 0, %s89
    $region4: #{tpu_custom_call.1} parent=1 // loop_header_branch
      %15 = sbr.rel (%p13) target = $region8
    $region5: #{tpu_custom_call.1} parent=1 // loop_body
      %s17 = ssub.s32 %s12, 1
      %s18 = ssub.s32 %s12, 2
      %s25 = sadd.s32 1, %s20
      %p26 = scmp.ge.s32.totalorder %s25, 1
      %s27 = scalar_select %p26, 0, %s25
      %s28 = sadd.s32 1, %s19
      %s29 = scalar_select %p26, %s28, %s19
      %p30 = scmp.ge.s32.totalorder %s29, 2
      %s31 = scalar_select %p30, 0, %s29
      %s32 = ssub.s32 %s19, %s31
      %s33 = ssub.s32 %s20, %s27
      %s34 = sor.u32 %s32, %s33
      %p35 = scmp.eq.s32.totalorder %s34, 0
      %s37 = sadd.s32 %s36, 1
      %s38 = scalar_select %p35, %s36, %s37
      %p41 = pneg %p35
      %p42 = scmp.eq.s32.totalorder %s12, 1
      %p43 = por %p41, %p42
      %p44 = scmp.ne.s32.totalorder %s36, %s39
      %p45 = scmp.eq.s32.totalorder %s12, 0
      %p46 = por %p44, %p45
      %p47 = scmp.ne.s32.totalorder %s36, %s39
      %p48 = scmp.eq.s32.totalorder %s17, 1
      %p49 = por %p47, %p48
      %p50 = scmp.ne.s32.totalorder %s39, %s40
      %p51 = scmp.eq.s32.totalorder %s17, 0
      %p52 = por %p50, %p51
      %p53 = scmp.ne.s32.totalorder %s39, %s40
      %p54 = scmp.eq.s32.totalorder %s18, 1
      %p55 = por %p53, %p54
      %p57 = scmp.ne.s32.totalorder %s40, %s56
      %p58 = scmp.eq.s32.totalorder %s18, 0
      %p59 = por %p57, %p58
      %s61 = sadd.s32 %s60, 1
      %p64 = scmp.eq.s32.totalorder %s12, 1
      %p65 = scmp.ne.s32.totalorder %s60, %s62
      %p66 = scmp.eq.s32.totalorder %s12, 0
      %p67 = por %p65, %p66
      %p68 = scmp.ne.s32.totalorder %s60, %s62
      %p69 = scmp.eq.s32.totalorder %s17, 1
      %p70 = por %p68, %p69
      %p71 = scmp.ne.s32.totalorder %s62, %s63
      %p72 = scmp.eq.s32.totalorder %s17, 0
      %p73 = por %p71, %p72
      %p74 = scmp.ne.s32.totalorder %s62, %s63
      %p75 = scmp.eq.s32.totalorder %s18, 1
      %p76 = por %p74, %p75
      %p78 = scmp.ne.s32.totalorder %s63, %s77
      %p79 = scmp.eq.s32.totalorder %s18, 0
      %p80 = por %p78, %p79
      %s81 = ssub.s32 %s19, %s31
      %s82 = ssub.s32 %s20, %s27
      %s83 = sor.u32 %s81, %s82
      %p84 = scmp.eq.s32.totalorder %s83, 0
      %s86 = sadd.s32 %s85, 1
      %s87 = scalar_select %p84, %s85, %s86
      %p90 = pneg %p84
      %p91 = scmp.eq.s32.totalorder %s12, 1
      %p92 = por %p90, %p91
      %p93 = scmp.ne.s32.totalorder %s85, %s88
      %p94 = scmp.eq.s32.totalorder %s12, 0
      %p95 = por %p93, %p94
      %p96 = scmp.ne.s32.totalorder %s85, %s88
      %p97 = scmp.eq.s32.totalorder %s17, 1
      %p98 = por %p96, %p97
      %p99 = scmp.ne.s32.totalorder %s88, %s89
      %p100 = scmp.eq.s32.totalorder %s17, 0
      %p101 = por %p99, %p100
      %p102 = scmp.ne.s32.totalorder %s88, %s89
      %p103 = scmp.eq.s32.totalorder %s18, 1
      %p104 = por %p102, %p103
      %p106 = scmp.ne.s32.totalorder %s89, %s105
      %p107 = scmp.eq.s32.totalorder %s18, 0
      %p108 = por %p106, %p107
      %p109 = scmp.le.s32.totalorder 1, %s12
      %p110 = scmp.lt.s32.totalorder %s12, 3
      %p111 = pnand %p109, %p110
      %p112 = pneg %p111
      // Predicated region
      $region9: #{tpu_custom_call.1} parent=5 // pred_check
        _
      $region10: #{tpu_custom_call.1} parent=5 // pred_check_branch
        %114 = sbr.rel (%p111) target = $region12
      $region11: #{tpu_custom_call.1} parent=5 // pred_region
        %s115 = ssub.s32 %s12, 1
        // Predicated region
        $region13: #{tpu_custom_call.1} parent=11 // pred_check
          %p116 = pneg %p73
        $region14: #{tpu_custom_call.1} parent=11 // pred_check_branch
          %118 = sbr.rel (%p116) target = $region16
        $region15: #{tpu_custom_call.1} parent=11 // pred_region
          %s120 = ssub.s32 896, 896
          %121 = vsyncadd [#allocation5], %s120
          %s122 = sshll.u32 [#allocation4], 4
          %s123 = int_to_ptr.vmem [resolvable:$true] %s122
          %128 = dma.hbm_to_vmem [thread:$0]  %s1, 896, %s123, [#allocation5], 128, 128, 8
        $region16: #{tpu_custom_call.1} parent=11 // pred_fallthru
          _
      $region12: #{tpu_custom_call.1} parent=5 // pred_fallthru
        _
      %p129 = scmp.lt.s32.totalorder %s12, 2
      // Predicated region
      $region17: #{tpu_custom_call.1} parent=5 // pred_check
        %p130 = pneg %p129
      $region18: #{tpu_custom_call.1} parent=5 // pred_check_branch
        %132 = sbr.rel (%p130) target = $region20
      $region19: #{tpu_custom_call.1} parent=5 // pred_region
        // Predicated region
        $region21: #{tpu_custom_call.1} parent=19 // pred_check
          %p133 = pneg %p46
        $region22: #{tpu_custom_call.1} parent=19 // pred_check_branch
          %135 = sbr.rel (%p133) target = $region24
        $region23: #{tpu_custom_call.1} parent=19 // pred_region
          %s136 = sand.u32 %s36, 1
          %s137 = scalar_lea.sflag [#allocation3], %s136
          %s138 = sand.u32 %s36, 1
          %s139 = smul.addr %s138, 192
          %s140 = scalar_lea.vmem [#allocation2], %s139
          %s141 = smul.u32 2, %s20
          %s143 = ssub.s32 3072, 3072
          %144 = vsyncadd %s137, %s143
          %s145 = smul.addr %s19, 24
          %s146 = sadd.s32 %s141, %s145
          %s147 = smul.addr %s146, 128
          %s148 = scalar_lea.hbm %s0, %s147
          %s149 = sshll.u32 %s140, 4
          %s150 = int_to_ptr.vmem [resolvable:$true] %s149
          %155 = dma.hbm_to_vmem [thread:$0]  %s148, 3072, %s150, %s137, 256, 256, 16
        $region24: #{tpu_custom_call.1} parent=19 // pred_fallthru
          _
      $region20: #{tpu_custom_call.1} parent=5 // pred_fallthru
        _
      %p156 = scmp.le.s32.totalorder 1, %s12
      %p157 = scmp.lt.s32.totalorder %s12, 3
      %p158 = pnand %p156, %p157
      %p159 = pneg %p158
      // Predicated region
      $region25: #{tpu_custom_call.1} parent=5 // pred_check
        _
      $region26: #{tpu_custom_call.1} parent=5 // pred_check_branch
        %161 = sbr.rel (%p158) target = $region28
      $region27: #{tpu_custom_call.1} parent=5 // pred_region
        %s162 = ssub.s32 %s12, 1
        %s163 = sand.u32 %s39, 1
        %s164 = scalar_lea.sflag [#allocation3], %s163
        %s165 = sand.u32 %s39, 1
        %s166 = smul.addr %s165, 192
        %s167 = scalar_lea.vmem [#allocation2], %s166
        // Predicated region
        $region29: #{tpu_custom_call.1} parent=27 // pred_check
          %p168 = pneg %p52
        $region30: #{tpu_custom_call.1} parent=27 // pred_check_branch
          %170 = sbr.rel (%p168) target = $region32
        $region31: #{tpu_custom_call.1} parent=27 // pred_region
          %171 = dma.done %s164, 3072
        $region32: #{tpu_custom_call.1} parent=27 // pred_fallthru
          _
        // Predicated region
        $region33: #{tpu_custom_call.1} parent=27 // pred_check
          %p172 = pneg %p73
        $region34: #{tpu_custom_call.1} parent=27 // pred_check_branch
          %174 = sbr.rel (%p172) target = $region36
        $region35: #{tpu_custom_call.1} parent=27 // pred_region
          %175 = dma.done [#allocation5], 896
        $region36: #{tpu_custom_call.1} parent=27 // pred_fallthru
          _
        %s176 = sand.u32 %s39, 1
        %s177 = scalar_lea.sflag [#allocation3], %s176
        %s178 = sand.u32 %s39, 1
        %s179 = smul.addr %s178, 192
        %s180 = scalar_lea.vmem [#allocation2], %s179
        %p181 = pneg %p52
        %p182 = pneg %p49
        %p183 = pneg %p73
        %p184 = pneg %p70
        %p185 = pneg %p101
        %p186 = pneg %p98
        %s187 = smul.u32 2, %s22
        %p188 = scmp.lt.s32.totalorder %s21, 1
        %s189 = scalar_select %p188, %s21, 1
        %p190 = scmp.lt.s32.totalorder %s187, 1
        %s191 = scalar_select %p190, %s187, 1
        %s192 = smul.addr %s189, 14
        %s193 = sadd.s32 %s191, %s192
        %s194 = smul.addr %s193, 8
        %s195 = scalar_lea.vmem %s2, %s194
        %s196 = smul.u32 2, %s22
        %s197 = smul.u32 2, %s22
        %p198 = scmp.lt.s32.totalorder %s21, 1
        %s199 = scalar_select %p198, %s21, 1
        %p200 = scmp.lt.s32.totalorder %s197, 1
        %s201 = scalar_select %p200, %s197, 1
        %s202 = smul.addr %s199, 14
        %s203 = sadd.s32 %s201, %s202
        %s204 = smul.addr %s203, 8
        %s205 = scalar_lea.vmem %s2, %s204
        %s206 = smul.u32 2, %s22
        %v207 = vld [vmem:[#allocation4] sm:$0xff]
        %v208 = vld [vmem:[#allocation4 + $0x8] sm:$0xff]
        %v209 = vld [vmem:[#allocation4 + $0x10] sm:$0xff]
        %v210 = vld [vmem:[#allocation4 + $0x18] sm:$0xff]
        %v211 = vld [vmem:[#allocation4 + $0x20] sm:$0xff]
        %v212 = vld [vmem:[#allocation4 + $0x28] sm:$0xff]
        %v213 = vld [vmem:[#allocation4 + $0x30] sm:$0x7f]
        %v214 = vld [vmem:[%s167] sm:$0xff]
        %v215 = vld [vmem:[%s167 + $0x8] sm:$0xff]
        %v216 = vld [vmem:[%s167 + $0x10] sm:$0xff]
        %v217 = vld [vmem:[%s167 + $0x18] sm:$0xff]
        %v218 = vld [vmem:[%s167 + $0x20] sm:$0xff]
        %v219 = vld [vmem:[%s167 + $0x28] sm:$0xff]
        %v220 = vld [vmem:[%s167 + $0x30] sm:$0xff]
        %v221 = vld [vmem:[%s167 + $0x38] sm:$0xff]
        %v222 = vld [vmem:[%s167 + $0x40] sm:$0xff]
        %v223 = vld [vmem:[%s167 + $0x48] sm:$0xff]
        %v224 = vld [vmem:[%s167 + $0x50] sm:$0xff]
        %v225 = vld [vmem:[%s167 + $0x58] sm:$0xff]
        %v226 = vld [vmem:[%s167 + $0x60] sm:$0xff]
        %v227 = vld [vmem:[%s167 + $0x68] sm:$0xff]
        %v228 = vld [vmem:[%s167 + $0x70] sm:$0xff]
        %v229 = vld [vmem:[%s167 + $0x78] sm:$0xff]
        %v230 = vld [vmem:[%s167 + $0x80] sm:$0xff]
        %v231 = vld [vmem:[%s167 + $0x88] sm:$0xff]
        %v232 = vld [vmem:[%s167 + $0x90] sm:$0xff]
        %v233 = vld [vmem:[%s167 + $0x98] sm:$0xff]
        %v234 = vld [vmem:[%s167 + $0xa0] sm:$0xff]
        %v235 = vld [vmem:[%s167 + $0xa8] sm:$0xff]
        %v236 = vld [vmem:[%s167 + $0xb0] sm:$0xff]
        %v237 = vld [vmem:[%s167 + $0xb8] sm:$0xff]
        %vm238 = vcmask 785408
        %v240 = vsel %vm238, %v207, 0
        %v243 = vsel %vm238, %v208, 0
        %v246 = vsel %vm238, %v209, 0
        %v249 = vsel %vm238, %v210, 0
        %v252 = vsel %vm238, %v211, 0
        %v255 = vsel %vm238, %v212, 0
        %v258 = vsel %vm238, %v213, 0
        %260 = vmatprep.subr.mxu0 %v215
        %261 = vmatpush1.msra.mxu0 %v214
        %262 = vmatprep.subr.mxu0 %v217
        %263 = vmatpush1.msra.mxu0 %v216
        %264 = vmatprep.subr.mxu0 %v219
        %265 = vmatpush1.msra.mxu0 %v218
        %266 = vmatprep.subr.mxu0 %v221
        %267 = vmatpush1.msra.mxu0 %v220
        %268 = vmatprep.subr.mxu0 %v223
        %269 = vmatpush1.msra.mxu0 %v222
        %270 = vmatprep.subr.mxu0 %v225
        %271 = vmatpush1.msra.mxu0 %v224
        %272 = vmatprep.subr.mxu0 %v227
        %273 = vmatpush1.msra.mxu0 %v226
        %274 = vmatprep.subr.mxu0 %v229
        %275 = vmatpush1.msra.mxu0 %v228
        %276 = vmatprep.subr.mxu0 %v231
        %277 = vmatpush1.msra.mxu0 %v230
        %278 = vmatprep.subr.mxu0 %v233
        %279 = vmatpush1.msra.mxu0 %v232
        %280 = vmatprep.subr.mxu0 %v235
        %281 = vmatpush1.msra.mxu0 %v234
        %282 = vmatprep.subr.mxu0 %v237
        %283 = vmatpush1.msra.mxu0 %v236
        %284 = vmatprep.subr.mxu0 0.0
        %285 = vmatpush1.msra.mxu0 0.0
        %286 = vmatprep.subr.mxu0 0.0
        %287 = vmatpush1.msra.mxu0 0.0
        %288 = vmatprep.subr.mxu0 0.0
        %289 = vmatpush1.msra.mxu0 0.0
        %290 = vmatprep.subr.mxu0 0.0
        %291 = vmatpush1.msra.mxu0 0.0
        %292 = vmatprep.subr.mxu0 0.0
        %293 = vmatpush1.msra.mxu0 0.0
        %294 = vmatprep.subr.mxu0 0.0
        %295 = vmatpush1.msra.mxu0 0.0
        %296 = vmatprep.subr.mxu0 0.0
        %297 = vmatpush1.msra.mxu0 0.0
        %298 = vmatprep.subr.mxu0 0.0
        %299 = vmatpush1.msra.mxu0 0.0
        %300 = vmatprep.subr.mxu0 0.0
        %301 = vmatpush1.msra.mxu0 0.0
        %302 = vmatprep.subr.mxu0 0.0
        %303 = vmatpush1.msra.mxu0 0.0
        %304 = vmatprep.subr.mxu0 0.0
        %305 = vmatpush1.msra.mxu0 0.0
        %306 = vmatprep.subr.mxu0 0.0
        %307 = vmatpush1.msra.mxu0 0.0
        %308 = vmatprep.subr.mxu0 0.0
        %309 = vmatpush1.msra.mxu0 0.0
        %310 = vmatprep.subr.mxu0 0.0
        %311 = vmatpush1.msra.mxu0 0.0
        %312 = vmatprep.subr.mxu0 0.0
        %313 = vmatpush1.msra.mxu0 0.0
        %314 = vmatprep.subr.mxu0 0.0
        %315 = vmatpush1.msra.mxu0 0.0
        %316 = vmatprep.subr.mxu0 0.0
        %317 = vmatpush1.msra.mxu0 0.0
        %318 = vmatprep.subr.mxu0 0.0
        %319 = vmatpush1.msra.mxu0 0.0
        %320 = vmatprep.subr.mxu0 0.0
        %321 = vmatpush1.msra.mxu0 0.0
        %322 = vmatprep.subr.mxu0 0.0
        %323 = vmatpush1.msra.mxu0 0.0
        %324 = vmatprep.mubr.f32.mxu0 0.0
        %325 = vmatmul.mubr.f32.gmra.mrb[0].mxu0 %v240
        %v326 = vpop.f32.mrb[0].mxu0
        %v327 = vadd.f32 0.0, %v326
        %v328 = vpop.f32.mrb[0].mxu0
        %v329 = vadd.f32 0.0, %v328
        %330 = vmatprep.mubr.f32.mxu0 0.0
        %331 = vmatmul.mubr.f32.gmra.mrb[0].mxu0 %v243
        %v332 = vpop.f32.mrb[0].mxu0
        %v333 = vadd.f32 0.0, %v332
        %v334 = vpop.f32.mrb[0].mxu0
        %v335 = vadd.f32 0.0, %v334
        %336 = vmatprep.mubr.f32.mxu0 0.0
        %337 = vmatmul.mubr.f32.gmra.mrb[0].mxu0 %v246
        %v338 = vpop.f32.mrb[0].mxu0
        %v339 = vadd.f32 0.0, %v338
        %v340 = vpop.f32.mrb[0].mxu0
        %v341 = vadd.f32 0.0, %v340
        %342 = vmatprep.mubr.f32.mxu0 0.0
        %343 = vmatmul.mubr.f32.gmra.mrb[0].mxu0 %v249
        %v344 = vpop.f32.mrb[0].mxu0
        %v345 = vadd.f32 0.0, %v344
        %v346 = vpop.f32.mrb[0].mxu0
        %v347 = vadd.f32 0.0, %v346
        %348 = vmatprep.mubr.f32.mxu0 0.0
        %349 = vmatmul.mubr.f32.gmra.mrb[0].mxu0 %v252
        %v350 = vpop.f32.mrb[0].mxu0
        %v351 = vadd.f32 0.0, %v350
        %v352 = vpop.f32.mrb[0].mxu0
        %v353 = vadd.f32 0.0, %v352
        %354 = vmatprep.mubr.f32.mxu0 0.0
        %355 = vmatmul.mubr.f32.gmra.mrb[0].mxu0 %v255
        %v356 = vpop.f32.mrb[0].mxu0
        %v357 = vadd.f32 0.0, %v356
        %v358 = vpop.f32.mrb[0].mxu0
        %v359 = vadd.f32 0.0, %v358
        %360 = vmatprep.mubr.f32.mxu0 0.0
        %361 = vmatmul.mubr.f32.gmra.mrb[0].mxu0 %v258
        %v362 = vpop.f32.mrb[0].mxu0
        %v363 = vadd.f32 0.0, %v362
        %v364 = vpop.f32.mrb[0].mxu0
        %v365 = vadd.f32 0.0, %v364
        %366 = vdwg.mxu0
        %367 = vst [vmem:[%s205] sm:$0xff] %v327
        %368 = vst [vmem:[%s205 + $0x8] sm:$0xff] %v329
        %369 = vst [vmem:[%s205 + $0x10] sm:$0xff] %v333
        %370 = vst [vmem:[%s205 + $0x18] sm:$0xff] %v335
        %371 = vst [vmem:[%s205 + $0x20] sm:$0xff] %v339
        %372 = vst [vmem:[%s205 + $0x28] sm:$0xff] %v341
        %373 = vst [vmem:[%s205 + $0x30] sm:$0xff] %v345
        %374 = vst [vmem:[%s205 + $0x38] sm:$0xff] %v347
        %375 = vst [vmem:[%s205 + $0x40] sm:$0xff] %v351
        %376 = vst [vmem:[%s205 + $0x48] sm:$0xff] %v353
        %377 = vst [vmem:[%s205 + $0x50] sm:$0xff] %v357
        %378 = vst [vmem:[%s205 + $0x58] sm:$0xff] %v359
        %379 = vst [vmem:[%s205 + $0x60] sm:$0x7f] %v363
        %380 = vst [vmem:[%s205 + $0x68] sm:$0x7f] %v365
        %s381 = smul.u32 2, %s22
        %p382 = scmp.lt.s32.totalorder %s21, 1
        %s383 = scalar_select %p382, %s21, 1
        %p384 = scmp.lt.s32.totalorder %s381, 1
        %s385 = scalar_select %p384, %s381, 1
        %s386 = smul.addr %s383, 14
        %s387 = sadd.s32 %s385, %s386
        %s388 = smul.addr %s387, 8
        %s389 = scalar_lea.vmem %s2, %s388
        // Predicated region
        $region37: #{tpu_custom_call.1} parent=27 // pred_check
          %p390 = pneg %p98
        $region38: #{tpu_custom_call.1} parent=27 // pred_check_branch
          %392 = sbr.rel (%p390) target = $region40
        $region39: #{tpu_custom_call.1} parent=27 // pred_region
          %s393 = smul.u32 2, %s22
        $region40: #{tpu_custom_call.1} parent=27 // pred_fallthru
          _
      $region28: #{tpu_custom_call.1} parent=5 // pred_fallthru
        _
      %p394 = scmp.le.s32.totalorder 2, %s12
      // Predicated region
      $region41: #{tpu_custom_call.1} parent=5 // pred_check
        %p395 = pneg %p394
      $region42: #{tpu_custom_call.1} parent=5 // pred_check_branch
        %397 = sbr.rel (%p395) target = $region44
      $region43: #{tpu_custom_call.1} parent=5 // pred_region
        %s398 = ssub.s32 %s12, 2
        // Predicated region
        $region45: #{tpu_custom_call.1} parent=43 // pred_check
          %p399 = pneg %p104
        $region46: #{tpu_custom_call.1} parent=43 // pred_check_branch
          %401 = sbr.rel (%p399) target = $region48
        $region47: #{tpu_custom_call.1} parent=43 // pred_region
          %s402 = smul.u32 2, %s24
          %p403 = scmp.lt.s32.totalorder %s23, 1
          %s404 = scalar_select %p403, %s23, 1
          %p405 = scmp.lt.s32.totalorder %s402, 1
          %s406 = scalar_select %p405, %s402, 1
          %s407 = smul.addr %s404, 14
          %s408 = sadd.s32 %s406, %s407
          %s409 = smul.addr %s408, 8
          %s410 = scalar_lea.vmem %s2, %s409
        $region48: #{tpu_custom_call.1} parent=43 // pred_fallthru
          _
      $region44: #{tpu_custom_call.1} parent=5 // pred_fallthru
        _
    $region6: #{tpu_custom_call.1} parent=1 // loop_footer
      %s16 = sadd.s32 1, %s12
    $region7: #{tpu_custom_call.1} parent=1 // loop_footer_branch
      %11 = sbr.rel target = $region3
    $region8: #{tpu_custom_call.1} parent=1 // loop_exit
      _
    %411 = vsyncpa [#allocation3], 1
    %s412 = scalar_lea.sflag [#allocation3], 1
    %413 = vsyncpa %s412, 1
    %414 = vsyncpa [#allocation5], 1

</llo_original>
